<compile_context>
chip_gen: v7x
topology: tpu7x:2x2x1
jax: 0.10.0
libtpu: 0.0.40
codegen_flags: <defaults>
</compile_context>

<pallas_src>
import jax
import jax.numpy as jnp
from jax.experimental import pallas as pl
from jax.experimental.pallas import tpu as pltpu

_LANE_TILE = 1024              # lane axis: multiple of 128 -> unmasked vst
_ROW_TILE = 128                # 128*1024*4B = 512 KiB per block
_SINGLE_BLOCK_MAX = 64 * 1024  # elements; at/below this, one full-array block


def _relu_kernel(x_ref, o_ref):
    # Elementwise ReLU on the whole VMEM tile (single VPU max, no zeros tensor).
    o_ref[...] = jnp.maximum(x_ref[...], 0.0)


def _relu_single_block(flat):
    # Tiny tensors: one block covering the full (1, total) lane-dense slab.
    x2d = flat.reshape(1, flat.shape[0])
    out2d = pl.pallas_call(
        _relu_kernel,
        out_shape=jax.ShapeDtypeStruct(x2d.shape, x2d.dtype),
        in_specs=[pl.BlockSpec(x2d.shape, lambda: (0, 0))],
        out_specs=pl.BlockSpec(x2d.shape, lambda: (0, 0)),
        input_output_aliases={0: 0},  # ReLU is in-place safe
    )(x2d)
    return out2d.reshape(flat.shape)


def _relu_tiled(flat):
    # Larger activations: pad to a whole number of (128, 1024) tiles and grid
    # over the row axis with double-buffered, lane-dense blocks.
    total = flat.shape[0]
    block = _ROW_TILE * _LANE_TILE
    padded = pl.cdiv(total, block) * block
    if padded != total:
        flat = jnp.pad(flat, (0, padded - total))
    x2d = flat.reshape(padded // _LANE_TILE, _LANE_TILE)
    out2d = pl.pallas_call(
        _relu_kernel,
        out_shape=jax.ShapeDtypeStruct(x2d.shape, x2d.dtype),
        grid=(x2d.shape[0] // _ROW_TILE,),
        in_specs=[pl.BlockSpec((_ROW_TILE, _LANE_TILE), lambda i: (i, 0))],
        out_specs=pl.BlockSpec((_ROW_TILE, _LANE_TILE), lambda i: (i, 0)),
        input_output_aliases={0: 0},
        compiler_params=pltpu.CompilerParams(
            dimension_semantics=("parallel",)),
    )(x2d)
    return out2d.reshape(-1)[:total]


@jax.jit
def relu_pallas(x: jax.Array) -> jax.Array:
    """ReLU on an NCHW tensor via a Pallas TPU kernel (shape-preserving)."""
    # TODO(synk): in a full RegNet graph this ReLU should be fused as an epilogue
    # of the preceding conv/matmul kernel instead of a standalone pallas_call.
    flat = x.reshape(-1)
    if flat.shape[0] <= _SINGLE_BLOCK_MAX:
        out = _relu_single_block(flat)
    else:
        out = _relu_tiled(flat)
    return out.reshape(x.shape)


if __name__ == "__main__":
    key = jax.random.PRNGKey(0)
    # Matches the module's forward input shape: [1, 308, 1, 1]
    x = jax.random.normal(key, (1, 308, 1, 1), dtype=jnp.float32)

    y = relu_pallas(x)
    jax.block_until_ready(y)
    y_ref = jnp.maximum(x, 0.0)
    assert y.shape == (1, 308, 1, 1)
    assert jnp.allclose(y, y_ref), "mismatch vs reference relu (tiny path)"

    # Also exercise the tiled (grid) path used when the wrapper sees larger
    # activations, so both code paths are validated on-device.
    x_big = jax.random.normal(jax.random.PRNGKey(1), (4, 256, 16, 16),
                              dtype=jnp.float32)
    y_big = relu_pallas(x_big)
    jax.block_until_ready(y_big)
    assert jnp.allclose(y_big, jnp.maximum(x_big, 0.0)), \
        "mismatch vs reference relu (tiled path)"

    print("KERNEL_OK")
</pallas_src>

<mosaic_0001>
module attributes {stable_mosaic.version = 11 : i64} {
  func.func @_relu_kernel(%arg0: memref<1x308xf32, #tpu.memory_space<vmem>>, %arg1: memref<1x308xf32, #tpu.memory_space<vmem>>) attributes {dimension_semantics = [], scalar_prefetch = 0 : i64, scratch_operands = 0 : i64, tpu.core_type = #tpu.core_type<tc>} {
    %c0 = arith.constant 0 : index
    %c0_0 = arith.constant 0 : index
    %0 = vector.load %arg0[%c0, %c0_0] : memref<1x308xf32, #tpu.memory_space<vmem>>, vector<1x308xf32>
    %cst = arith.constant 0.000000e+00 : f32
    %1 = vector.broadcast %cst : f32 to vector<1x308xf32>
    %2 = arith.maximumf %0, %1 : vector<1x308xf32>
    %c0_1 = arith.constant 0 : index
    %c0_2 = arith.constant 0 : index
    %3 = vector.load %arg1[%c0_1, %c0_2] : memref<1x308xf32, #tpu.memory_space<vmem>>, vector<1x308xf32>
    tpu.vector_store %arg1[%c0_1, %c0_2], %2 {strides = array<i32>} : memref<1x308xf32, #tpu.memory_space<vmem>>, vector<1x308xf32>,
    return
  }
}

</mosaic_0001>

<llo_original>
// kernel: relu_pallas.1
$region0: #{relu_pallas.1}
  #allocation0 [shape = 'u32[]', space=smem, size = 0x4, offset = 0x4, fixed_abs, tag = 'smem constant byte address 0x4 - core index']
  #allocation1 [shape = 'u32[144,128]{1,0:T(1,128)}', space=vmem, size = 0x12000, scoped, tag = 'internal scratch']
  %s0 = inlined_call_operand.vmem [shape: f32[1,308], index: 0, kind: input, shape index: {}, may-alias: {0,1}]
  %s1 = inlined_call_operand.vmem [shape: f32[1,308], index: 1, kind: output, shape index: {}, may-alias: {0,1}]
  %s2 = sld [smem:[#allocation0]]
  $region14: #{relu_pallas.1} parent=0
    _
  %s4 = ssub.s32 1, %s2
  %s5 = scalar_select 0, %s4, %s2
  // Predicated region
  $region2: #{relu_pallas.1} parent=0 // pred_check
    _
  $region3: #{relu_pallas.1} parent=0 // pred_check_branch
    %7 = sbr.rel (0) target = $region5
  $region4: #{relu_pallas.1} parent=0 // pred_region
    _
  $region5: #{relu_pallas.1} parent=0 // pred_fallthru
    _
  %v8 = vld [vmem:[%s0] sm:$0x7]
  %v9 = vmax.f32 %v8, 0.0
  %v10 = vlaneseq
  %vm11 = vcmp.ge.s32.totalorder %v10, 0
  %vm12 = vcmp.lt.s32.totalorder %v10, 308
  %vm13 = vmand %vm11, %vm12
  %14 = vst.msk [vmem:[%s1] sm:$0x7] %vm13, %v9
  // Predicated region
  $region6: #{relu_pallas.1} parent=0 // pred_check
    _
  $region7: #{relu_pallas.1} parent=0 // pred_check_branch
    %16 = sbr.rel (0) target = $region9
  $region8: #{relu_pallas.1} parent=0 // pred_region
    _
  $region9: #{relu_pallas.1} parent=0 // pred_fallthru
    _
  // Predicated region
  $region10: #{relu_pallas.1} parent=0 // pred_check
    _
  $region11: #{relu_pallas.1} parent=0 // pred_check_branch
    %18 = sbr.rel (0) target = $region13
  $region12: #{relu_pallas.1} parent=0 // pred_region
    _
  $region13: #{relu_pallas.1} parent=0 // pred_fallthru
    _

</llo_original>
